<compile_context>
chip_gen: v7x
topology: tpu7x:2x2x1
jax: 0.10.0
libtpu: 0.0.40
codegen_flags: <defaults>
</compile_context>

<pallas_src>
import jax
import jax.numpy as jnp
from jax.experimental import pallas as pl
from jax.experimental.pallas import tpu as pltpu

EPS = 1e-5
LANE = 128  # TPU lane width; feature dims are padded to this


def netgraphconv_kernel(a_ref, h_ref, w1_ref, bias_ref, w2_ref, out_ref):
    """One row-tile of nodes.

    a_ref   : (tm, N)              row tile of normalized adjacency
    h_ref   : (N, in_features)     full node features (constant block)
    w1_ref  : (in_features, LANE)  GraphConv weight with eval-BN folded, lane padded
    bias_ref: (2, LANE)            row 0 = folded GraphConv/BN bias, row 1 = Linear bias
    w2_ref  : (LANE, LANE)         final Linear weight, zero padded
    out_ref : (tm, LANE)           lane-dense output slab
    """
    # Feature transform (MXU).  Recomputed per tile so tiles stay independent.
    hw = jnp.dot(h_ref[...], w1_ref[...], preferred_element_type=jnp.float32)
    # Graph aggregation for this row tile (MXU) + folded BN bias.
    h1 = jnp.dot(a_ref[...], hw.astype(a_ref.dtype),
                 preferred_element_type=jnp.float32) + bias_ref[0:1, :]
    # ReLU; Dropout is identity in eval mode.
    h1 = jnp.maximum(h1, 0.0)
    # Final Linear layer (f32 epilogue), lane-dense store.
    out_ref[...] = (jnp.dot(h1, w2_ref[...], preferred_element_type=jnp.float32)
                    + bias_ref[1:2, :])


def netgraphconv_forward(a_hat, h, params, *, row_tile=64, use_bf16=False):
    (w1, b1, gamma, beta, rmean, rvar, w2, b2) = params
    n, in_features = h.shape
    hidden = w1.shape[1]
    out_features = w2.shape[1]

    # ---- host-side folding of eval-mode BatchNorm into GraphConv weight/bias ----
    scale = gamma * jax.lax.rsqrt(rvar + EPS)          # (1, hidden)
    w1f = w1 * scale                                   # (in, hidden)
    b1f = (b1 - rmean) * scale + beta                  # (1, hidden)

    # ---- lane-dense zero padding + single packed bias buffer ----
    w1p = jnp.zeros((in_features, LANE), jnp.float32).at[:, :hidden].set(w1f)
    w2p = jnp.zeros((LANE, LANE), jnp.float32).at[:hidden, :out_features].set(w2)
    bias = jnp.zeros((2, LANE), jnp.float32)
    bias = bias.at[0, :hidden].set(b1f[0])
    bias = bias.at[1, :out_features].set(b2[0])

    a_in, h_in, w1_in = a_hat, h, w1p
    if use_bf16:
        # bf16 matmul inputs (halves A_hat DMA traffic, fast MXU path); f32 accumulate.
        a_in = a_hat.astype(jnp.bfloat16)
        h_in = h.astype(jnp.bfloat16)
        w1_in = w1p.astype(jnp.bfloat16)

    tm = min(row_tile, n)
    assert n % tm == 0 and tm % 8 == 0, "row tile must divide N and be a multiple of 8"
    grid = (n // tm,)

    out_padded = pl.pallas_call(
        netgraphconv_kernel,
        out_shape=jax.ShapeDtypeStruct((n, LANE), jnp.float32),
        grid_spec=pl.GridSpec(
            grid=grid,
            in_specs=[
                pl.BlockSpec((tm, n), lambda i: (i, 0)),            # A_hat row tile
                pl.BlockSpec((n, in_features), lambda i: (0, 0)),   # H (full, DMA once)
                pl.BlockSpec((in_features, LANE), lambda i: (0, 0)),  # W1' (BN folded)
                pl.BlockSpec((2, LANE), lambda i: (0, 0)),          # packed biases
                pl.BlockSpec((LANE, LANE), lambda i: (0, 0)),       # W2 (padded)
            ],
            out_specs=pl.BlockSpec((tm, LANE), lambda i: (i, 0)),
        ),
        compiler_params=pltpu.CompilerParams(
            dimension_semantics=("parallel",)),   # row tiles shard across v7x TCs
    )(a_in, h_in, w1_in, bias, w2p)

    return out_padded[:, :out_features]


def make_params(key, in_features=64, hidden=10, out_features=2):
    k1, k2 = jax.random.split(key)
    # GraphConv weight/bias
    w1 = jax.random.normal(k1, (in_features, hidden), jnp.float32) * 0.1
    b1 = jnp.linspace(-0.1, 0.1, hidden, dtype=jnp.float32).reshape(1, hidden)
    # BatchNorm1d affine + running stats (deterministic, eval mode)
    gamma = jnp.ones((1, hidden), jnp.float32) * 1.1
    beta = jnp.full((1, hidden), 0.05, jnp.float32)
    rmean = jnp.linspace(-0.2, 0.2, hidden, dtype=jnp.float32).reshape(1, hidden)
    rvar = jnp.linspace(0.8, 1.2, hidden, dtype=jnp.float32).reshape(1, hidden)
    # last Linear layer
    w2 = jax.random.normal(k2, (hidden, out_features), jnp.float32) * 0.1
    b2 = jnp.linspace(0.01, -0.01, out_features, dtype=jnp.float32).reshape(1, out_features)
    return (w1, b1, gamma, beta, rmean, rvar, w2, b2)


def make_graph(key, n_nodes):
    # Random undirected graph with guaranteed nonzero degree; no self loops.
    logits = jax.random.uniform(key, (n_nodes, n_nodes))
    a = (logits > 0.7).astype(jnp.float32)
    a = jnp.maximum(a, a.T)                       # symmetrize
    a = a.at[jnp.diag_indices(n_nodes)].set(0.0)  # no self loops
    idx = jnp.arange(n_nodes)                     # ensure deg >= 1
    a = a.at[idx, (idx + 1) % n_nodes].set(1.0)
    a = a.at[(idx + 1) % n_nodes, idx].set(1.0)
    deg = jnp.sum(a, axis=1)
    d_inv_sqrt = 1.0 / jnp.sqrt(deg)
    a_hat = a * d_inv_sqrt[:, None] * d_inv_sqrt[None, :]
    return a_hat.astype(jnp.float32)


def reference_forward(a_hat, h, params):
    (w1, b1, gamma, beta, rmean, rvar, w2, b2) = params
    h1 = a_hat @ (h @ w1) + b1
    h1 = (h1 - rmean) / jnp.sqrt(rvar + EPS) * gamma + beta
    h1 = jnp.maximum(h1, 0.0)
    return h1 @ w2 + b2


if __name__ == "__main__":
    key = jax.random.PRNGKey(0)
    k_param, k_graph, k_feat = jax.random.split(key, 3)

    in_features, hidden, out_features = 64, 10, 2
    n_nodes = 128   # small, but exercises the tiled grid: grid = (2,) with tm=64

    params = make_params(k_param, in_features, hidden, out_features)
    a_hat = make_graph(k_graph, n_nodes)
    h = jax.random.normal(k_feat, (n_nodes, in_features), jnp.float32)

    # f32 path (exact vs reference)
    out = jax.block_until_ready(
        netgraphconv_forward(a_hat, h, params, row_tile=64))
    ref = reference_forward(a_hat, h, params)
    assert out.shape == (n_nodes, out_features)
    assert jnp.allclose(out, ref, atol=1e-4, rtol=1e-4), "f32 mismatch vs reference"

    # bf16 matmul-input path (v5e/v6e bandwidth/MXU optimization), loose tolerance
    out_bf16 = jax.block_until_ready(
        netgraphconv_forward(a_hat, h, params, row_tile=64, use_bf16=True))
    assert jnp.allclose(out_bf16, ref, atol=5e-2, rtol=5e-2), "bf16 mismatch vs reference"

    print("KERNEL_OK")
</pallas_src>

<mosaic_0001>
module attributes {stable_mosaic.version = 11 : i64} {
  func.func @netgraphconv_kernel(%arg0: i32, %arg1: memref<64x128xf32, #tpu.memory_space<vmem>>, %arg2: memref<128x64xf32, #tpu.memory_space<vmem>>, %arg3: memref<64x128xf32, #tpu.memory_space<vmem>>, %arg4: memref<2x128xf32, #tpu.memory_space<vmem>>, %arg5: memref<128x128xf32, #tpu.memory_space<vmem>>, %arg6: memref<64x128xf32, #tpu.memory_space<vmem>>) attributes {dimension_semantics = [#tpu.dimension_semantics<parallel>], iteration_bounds = array<i64: 2>, scalar_prefetch = 0 : i64, scratch_operands = 0 : i64, tpu.core_type = #tpu.core_type<tc>, window_params = [{transform_indices = @transform_0, window_bounds = array<i64: 64, 128>}, {pipeline_mode = #tpu.pipeline_mode<synchronous>, transform_indices = @transform_1, window_bounds = array<i64: 128, 64>}, {pipeline_mode = #tpu.pipeline_mode<synchronous>, transform_indices = @transform_2, window_bounds = array<i64: 64, 128>}, {pipeline_mode = #tpu.pipeline_mode<synchronous>, transform_indices = @transform_3, window_bounds = array<i64: 2, 128>}, {pipeline_mode = #tpu.pipeline_mode<synchronous>, transform_indices = @transform_4, window_bounds = array<i64: 128, 128>}, {transform_indices = @transform_5, window_bounds = array<i64: 64, 128>}]} {
    %c0 = arith.constant 0 : index
    %c0_0 = arith.constant 0 : index
    %0 = vector.load %arg2[%c0, %c0_0] : memref<128x64xf32, #tpu.memory_space<vmem>>, vector<128x64xf32>
    %c0_1 = arith.constant 0 : index
    %c0_2 = arith.constant 0 : index
    %1 = vector.load %arg3[%c0_1, %c0_2] : memref<64x128xf32, #tpu.memory_space<vmem>>, vector<64x128xf32>
    %cst = arith.constant dense<0.000000e+00> : vector<128x128xf32>
    %2 = tpu.matmul %0, %1, %cst {dimension_numbers = #tpu.dot_dimension_numbers<[1], [0], [0], [1], [0, 0, 1, 1], [], []>} : vector<128x64xf32>, vector<64x128xf32>, vector<128x128xf32> -> vector<128x128xf32>
    %c0_3 = arith.constant 0 : index
    %c0_4 = arith.constant 0 : index
    %3 = vector.load %arg1[%c0_3, %c0_4] : memref<64x128xf32, #tpu.memory_space<vmem>>, vector<64x128xf32>
    %cst_5 = arith.constant dense<0.000000e+00> : vector<64x128xf32>
    %4 = tpu.matmul %3, %2, %cst_5 {dimension_numbers = #tpu.dot_dimension_numbers<[1], [0], [0], [1], [0, 0, 1, 1], [], []>} : vector<64x128xf32>, vector<128x128xf32>, vector<64x128xf32> -> vector<64x128xf32>
    %c0_6 = arith.constant 0 : index
    %c0_7 = arith.constant 0 : index
    %5 = vector.load %arg4[%c0_6, %c0_7] : memref<2x128xf32, #tpu.memory_space<vmem>>, vector<1x128xf32>
    %6 = vector.broadcast %5 : vector<1x128xf32> to vector<64x128xf32>
    %7 = arith.addf %4, %6 : vector<64x128xf32>
    %cst_8 = arith.constant 0.000000e+00 : f32
    %8 = vector.broadcast %cst_8 : f32 to vector<64x128xf32>
    %9 = arith.maximumf %7, %8 : vector<64x128xf32>
    %c0_9 = arith.constant 0 : index
    %c0_10 = arith.constant 0 : index
    %10 = vector.load %arg5[%c0_9, %c0_10] : memref<128x128xf32, #tpu.memory_space<vmem>>, vector<128x128xf32>
    %cst_11 = arith.constant dense<0.000000e+00> : vector<64x128xf32>
    %11 = tpu.matmul %9, %10, %cst_11 {dimension_numbers = #tpu.dot_dimension_numbers<[1], [0], [0], [1], [0, 0, 1, 1], [], []>} : vector<64x128xf32>, vector<128x128xf32>, vector<64x128xf32> -> vector<64x128xf32>
    %c1 = arith.constant 1 : index
    %c0_12 = arith.constant 0 : index
    %12 = vector.load %arg4[%c1, %c0_12] : memref<2x128xf32, #tpu.memory_space<vmem>>, vector<1x128xf32>
    %13 = vector.broadcast %12 : vector<1x128xf32> to vector<64x128xf32>
    %14 = arith.addf %11, %13 : vector<64x128xf32>
    %c0_13 = arith.constant 0 : index
    %c0_14 = arith.constant 0 : index
    %15 = vector.load %arg6[%c0_13, %c0_14] : memref<64x128xf32, #tpu.memory_space<vmem>>, vector<64x128xf32>
    tpu.vector_store %arg6[%c0_13, %c0_14], %14 {strides = array<i32>} : memref<64x128xf32, #tpu.memory_space<vmem>>, vector<64x128xf32>,
    return
  }
  func.func @transform_0(%arg0: i32) -> (i32, i32) {
    %c0_i32 = arith.constant 0 : i32
    %c0_i32_0 = arith.constant 0 : i32
    return %arg0, %c0_i32 : i32, i32
  }
  func.func @transform_1(%arg0: i32) -> (i32, i32) {
    %c0_i32 = arith.constant 0 : i32
    %c0_i32_0 = arith.constant 0 : i32
    %c0_i32_1 = arith.constant 0 : i32
    return %c0_i32, %c0_i32_0 : i32, i32
  }
  func.func @transform_2(%arg0: i32) -> (i32, i32) {
    %c0_i32 = arith.constant 0 : i32
    %c0_i32_0 = arith.constant 0 : i32
    %c0_i32_1 = arith.constant 0 : i32
    return %c0_i32, %c0_i32_0 : i32, i32
  }
  func.func @transform_3(%arg0: i32) -> (i32, i32) {
    %c0_i32 = arith.constant 0 : i32
    %c0_i32_0 = arith.constant 0 : i32
    %c0_i32_1 = arith.constant 0 : i32
    return %c0_i32, %c0_i32_0 : i32, i32
  }
  func.func @transform_4(%arg0: i32) -> (i32, i32) {
    %c0_i32 = arith.constant 0 : i32
    %c0_i32_0 = arith.constant 0 : i32
    %c0_i32_1 = arith.constant 0 : i32
    return %c0_i32, %c0_i32_0 : i32, i32
  }
  func.func @transform_5(%arg0: i32) -> (i32, i32) {
    %c0_i32 = arith.constant 0 : i32
    %c0_i32_0 = arith.constant 0 : i32
    return %arg0, %c0_i32 : i32, i32
  }
}

</mosaic_0001>

<llo_original>
// kernel: tpu_custom_call.1
$region0: #{tpu_custom_call.1}
  #allocation0 [shape = 'u32[]', space=smem, size = 0x4, offset = 0x4, fixed_abs, tag = 'smem constant byte address 0x4 - core index']
  #allocation1 [shape = 'u32[144,128]{1,0:T(1,128)}', space=vmem, size = 0x12000, scoped, tag = 'internal scratch']
  %s0 = inlined_call_operand.vmem [shape: f32[128,128], index: 0, kind: input, shape index: {}]
  %s1 = inlined_call_operand.vmem [shape: f32[128,64], index: 1, kind: input, shape index: {}]
  %s2 = inlined_call_operand.vmem [shape: f32[64,128], index: 2, kind: input, shape index: {}]
  %s3 = inlined_call_operand.vmem [shape: f32[2,128], index: 3, kind: input, shape index: {}]
  %s4 = inlined_call_operand.hbm [shape: f32[128,128], index: 4, kind: input, shape index: {}]
  %s5 = inlined_call_operand.hbm [shape: f32[128,128], index: 5, kind: output, shape index: {}]
  %s6 = sld [smem:[#allocation0]]
  $region57: #{tpu_custom_call.1} parent=0
    _
  %s8 = ssub.s32 1, %s6
  %s9 = scalar_select 0, %s8, %s6
  $region1: #{tpu_custom_call.1} parent=0
    #allocation2 [shape = 'u8[65536]{0}', space=vmem, size = 0x10000, scoped, tag = 'input window, operand 4, single buffered']
    #allocation3 [shape = 's32[2]{0}', space=sflag, size = 0x8, scoped, tag = 'scoped memory for tpu_custom_call.1']
    #allocation4 [shape = 's32[2]{0}', space=sflag, size = 0x8, scoped, tag = 'scoped memory for tpu_custom_call.1']
    #allocation5 [shape = 'u8[65536]{0}', space=vmem, size = 0x10000, scoped, tag = 'output window, operand 0']
    %10 = vsyncpa [#allocation3], 0
    %11 = vsyncpa [#allocation4], 0
    %s12 = scalar_lea.sflag [#allocation4], 1
    %13 = vsyncpa %s12, 0
    loop: start=0, step=1, limit=4
    $region2: #{tpu_custom_call.1} parent=1 // loop_pre_header
      _
    $region3: #{tpu_custom_call.1} parent=1 // loop_header
      %s15 = sphi 0, %s19
      %p16 = scmp.ge.s32.totalorder %s15, 4
      %s25 = sphi 0, %s27
      %s28 = sphi 0, %s25
      %s29 = sphi 0, %s28
      %s45 = sphi 0, %s29
      %s49 = sphi 0, %s49
      %s51 = sphi 0, %s49
      %s52 = sphi 0, %s51
      %s66 = sphi 0, %s52
      %s70 = sphi 0, %s70
      %s72 = sphi 0, %s70
      %s73 = sphi 0, %s72
      %s87 = sphi 0, %s73
      %s91 = sphi 0, %s91
      %s93 = sphi 0, %s91
      %s94 = sphi 0, %s93
      %s108 = sphi 0, %s94
      %s112 = sphi 0, %s112
      %s114 = sphi 0, %s112
      %s115 = sphi 0, %s114
      %s129 = sphi 0, %s115
      %s135 = sphi 0, %s137
      %s138 = sphi 0, %s135
      %s139 = sphi 0, %s138
      %s155 = sphi 0, %s139
    $region4: #{tpu_custom_call.1} parent=1 // loop_header_branch
      %18 = sbr.rel (%p16) target = $region8
    $region5: #{tpu_custom_call.1} parent=1 // loop_body
      %s20 = ssub.s32 %s15, 1
      %s21 = ssub.s32 %s15, 2
      %s22 = sadd.s32 %s15, 1
      %s23 = ssub.s32 %s15, %s22
      %p24 = scmp.eq.s32.totalorder %s23, 0
      %s26 = sadd.s32 %s25, 1
      %s27 = scalar_select %p24, %s25, %s26
      %p30 = pneg %p24
      %p31 = scmp.eq.s32.totalorder %s15, 1
      %p32 = por %p30, %p31
      %p33 = scmp.ne.s32.totalorder %s25, %s28
      %p34 = scmp.eq.s32.totalorder %s15, 0
      %p35 = por %p33, %p34
      %p36 = scmp.ne.s32.totalorder %s25, %s28
      %p37 = scmp.eq.s32.totalorder %s20, 1
      %p38 = por %p36, %p37
      %p39 = scmp.ne.s32.totalorder %s28, %s29
      %p40 = scmp.eq.s32.totalorder %s20, 0
      %p41 = por %p39, %p40
      %p42 = scmp.ne.s32.totalorder %s28, %s29
      %p43 = scmp.eq.s32.totalorder %s21, 1
      %p44 = por %p42, %p43
      %p46 = scmp.ne.s32.totalorder %s29, %s45
      %p47 = scmp.eq.s32.totalorder %s21, 0
      %p48 = por %p46, %p47
      %s50 = sadd.s32 %s49, 1
      %p53 = scmp.eq.s32.totalorder %s15, 1
      %p54 = scmp.ne.s32.totalorder %s49, %s51
      %p55 = scmp.eq.s32.totalorder %s15, 0
      %p56 = por %p54, %p55
      %p57 = scmp.ne.s32.totalorder %s49, %s51
      %p58 = scmp.eq.s32.totalorder %s20, 1
      %p59 = por %p57, %p58
      %p60 = scmp.ne.s32.totalorder %s51, %s52
      %p61 = scmp.eq.s32.totalorder %s20, 0
      %p62 = por %p60, %p61
      %p63 = scmp.ne.s32.totalorder %s51, %s52
      %p64 = scmp.eq.s32.totalorder %s21, 1
      %p65 = por %p63, %p64
      %p67 = scmp.ne.s32.totalorder %s52, %s66
      %p68 = scmp.eq.s32.totalorder %s21, 0
      %p69 = por %p67, %p68
      %s71 = sadd.s32 %s70, 1
      %p74 = scmp.eq.s32.totalorder %s15, 1
      %p75 = scmp.ne.s32.totalorder %s70, %s72
      %p76 = scmp.eq.s32.totalorder %s15, 0
      %p77 = por %p75, %p76
      %p78 = scmp.ne.s32.totalorder %s70, %s72
      %p79 = scmp.eq.s32.totalorder %s20, 1
      %p80 = por %p78, %p79
      %p81 = scmp.ne.s32.totalorder %s72, %s73
      %p82 = scmp.eq.s32.totalorder %s20, 0
      %p83 = por %p81, %p82
      %p84 = scmp.ne.s32.totalorder %s72, %s73
      %p85 = scmp.eq.s32.totalorder %s21, 1
      %p86 = por %p84, %p85
      %p88 = scmp.ne.s32.totalorder %s73, %s87
      %p89 = scmp.eq.s32.totalorder %s21, 0
      %p90 = por %p88, %p89
      %s92 = sadd.s32 %s91, 1
      %p95 = scmp.eq.s32.totalorder %s15, 1
      %p96 = scmp.ne.s32.totalorder %s91, %s93
      %p97 = scmp.eq.s32.totalorder %s15, 0
      %p98 = por %p96, %p97
      %p99 = scmp.ne.s32.totalorder %s91, %s93
      %p100 = scmp.eq.s32.totalorder %s20, 1
      %p101 = por %p99, %p100
      %p102 = scmp.ne.s32.totalorder %s93, %s94
      %p103 = scmp.eq.s32.totalorder %s20, 0
      %p104 = por %p102, %p103
      %p105 = scmp.ne.s32.totalorder %s93, %s94
      %p106 = scmp.eq.s32.totalorder %s21, 1
      %p107 = por %p105, %p106
      %p109 = scmp.ne.s32.totalorder %s94, %s108
      %p110 = scmp.eq.s32.totalorder %s21, 0
      %p111 = por %p109, %p110
      %s113 = sadd.s32 %s112, 1
      %p116 = scmp.eq.s32.totalorder %s15, 1
      %p117 = scmp.ne.s32.totalorder %s112, %s114
      %p118 = scmp.eq.s32.totalorder %s15, 0
      %p119 = por %p117, %p118
      %p120 = scmp.ne.s32.totalorder %s112, %s114
      %p121 = scmp.eq.s32.totalorder %s20, 1
      %p122 = por %p120, %p121
      %p123 = scmp.ne.s32.totalorder %s114, %s115
      %p124 = scmp.eq.s32.totalorder %s20, 0
      %p125 = por %p123, %p124
      %p126 = scmp.ne.s32.totalorder %s114, %s115
      %p127 = scmp.eq.s32.totalorder %s21, 1
      %p128 = por %p126, %p127
      %p130 = scmp.ne.s32.totalorder %s115, %s129
      %p131 = scmp.eq.s32.totalorder %s21, 0
      %p132 = por %p130, %p131
      %s133 = ssub.s32 %s15, %s22
      %p134 = scmp.eq.s32.totalorder %s133, 0
      %s136 = sadd.s32 %s135, 1
      %s137 = scalar_select %p134, %s135, %s136
      %p140 = pneg %p134
      %p141 = scmp.eq.s32.totalorder %s15, 1
      %p142 = por %p140, %p141
      %p143 = scmp.ne.s32.totalorder %s135, %s138
      %p144 = scmp.eq.s32.totalorder %s15, 0
      %p145 = por %p143, %p144
      %p146 = scmp.ne.s32.totalorder %s135, %s138
      %p147 = scmp.eq.s32.totalorder %s20, 1
      %p148 = por %p146, %p147
      %p149 = scmp.ne.s32.totalorder %s138, %s139
      %p150 = scmp.eq.s32.totalorder %s20, 0
      %p151 = por %p149, %p150
      %p152 = scmp.ne.s32.totalorder %s138, %s139
      %p153 = scmp.eq.s32.totalorder %s21, 1
      %p154 = por %p152, %p153
      %p156 = scmp.ne.s32.totalorder %s139, %s155
      %p157 = scmp.eq.s32.totalorder %s21, 0
      %p158 = por %p156, %p157
      %p159 = scmp.le.s32.totalorder 1, %s15
      %p160 = scmp.lt.s32.totalorder %s15, 3
      %p161 = pnand %p159, %p160
      %p162 = pneg %p161
      // Predicated region
      $region9: #{tpu_custom_call.1} parent=5 // pred_check
        _
      $region10: #{tpu_custom_call.1} parent=5 // pred_check_branch
        %164 = sbr.rel (%p161) target = $region12
      $region11: #{tpu_custom_call.1} parent=5 // pred_region
        %s165 = ssub.s32 %s15, 1
        // Predicated region
        $region13: #{tpu_custom_call.1} parent=11 // pred_check
          %p166 = pneg %p62
        $region14: #{tpu_custom_call.1} parent=11 // pred_check_branch
          %168 = sbr.rel (%p166) target = $region16
        $region15: #{tpu_custom_call.1} parent=11 // pred_region
          _
        $region16: #{tpu_custom_call.1} parent=11 // pred_fallthru
          _
        // Predicated region
        $region17: #{tpu_custom_call.1} parent=11 // pred_check
          %p169 = pneg %p83
        $region18: #{tpu_custom_call.1} parent=11 // pred_check_branch
          %171 = sbr.rel (%p169) target = $region20
        $region19: #{tpu_custom_call.1} parent=11 // pred_region
          _
        $region20: #{tpu_custom_call.1} parent=11 // pred_fallthru
          _
        // Predicated region
        $region21: #{tpu_custom_call.1} parent=11 // pred_check
          %p172 = pneg %p104
        $region22: #{tpu_custom_call.1} parent=11 // pred_check_branch
          %174 = sbr.rel (%p172) target = $region24
        $region23: #{tpu_custom_call.1} parent=11 // pred_region
          _
        $region24: #{tpu_custom_call.1} parent=11 // pred_fallthru
          _
        // Predicated region
        $region25: #{tpu_custom_call.1} parent=11 // pred_check
          %p175 = pneg %p125
        $region26: #{tpu_custom_call.1} parent=11 // pred_check_branch
          %177 = sbr.rel (%p175) target = $region28
        $region27: #{tpu_custom_call.1} parent=11 // pred_region
          %s179 = ssub.s32 2048, 2048
          %180 = vsyncadd [#allocation3], %s179
          %s181 = sshll.u32 [#allocation2], 4
          %s182 = int_to_ptr.vmem [resolvable:$true] %s181
          %187 = dma.hbm_to_vmem [thread:$0]  %s4, 2048, %s182, [#allocation3], 128, 128, 8
        $region28: #{tpu_custom_call.1} parent=11 // pred_fallthru
          _
      $region12: #{tpu_custom_call.1} parent=5 // pred_fallthru
        _
      %p188 = scmp.lt.s32.totalorder %s15, 2
      // Predicated region
      $region29: #{tpu_custom_call.1} parent=5 // pred_check
        %p189 = pneg %p188
      $region30: #{tpu_custom_call.1} parent=5 // pred_check_branch
        %191 = sbr.rel (%p189) target = $region32
      $region31: #{tpu_custom_call.1} parent=5 // pred_region
        // Predicated region
        $region33: #{tpu_custom_call.1} parent=31 // pred_check
          %p192 = pneg %p35
        $region34: #{tpu_custom_call.1} parent=31 // pred_check_branch
          %194 = sbr.rel (%p192) target = $region36
        $region35: #{tpu_custom_call.1} parent=31 // pred_region
          %s195 = smul.u32 8, %s15
          %p196 = scmp.lt.s32.totalorder %s195, 15
          %s197 = scalar_select %p196, %s195, 15
          %s198 = smul.addr %s197, 8
          %s199 = scalar_lea.vmem %s0, %s198
          %s200 = smul.u32 8, %s15
        $region36: #{tpu_custom_call.1} parent=31 // pred_fallthru
          _
      $region32: #{tpu_custom_call.1} parent=5 // pred_fallthru
        _
      %p201 = scmp.le.s32.totalorder 1, %s15
      %p202 = scmp.lt.s32.totalorder %s15, 3
      %p203 = pnand %p201, %p202
      %p204 = pneg %p203
      // Predicated region
      $region37: #{tpu_custom_call.1} parent=5 // pred_check
        _
      $region38: #{tpu_custom_call.1} parent=5 // pred_check_branch
        %206 = sbr.rel (%p203) target = $region40
      $region39: #{tpu_custom_call.1} parent=5 // pred_region
        %s207 = ssub.s32 %s15, 1
        // Predicated region
        $region41: #{tpu_custom_call.1} parent=39 // pred_check
          %p208 = pneg %p125
        $region42: #{tpu_custom_call.1} parent=39 // pred_check_branch
          %210 = sbr.rel (%p208) target = $region44
        $region43: #{tpu_custom_call.1} parent=39 // pred_region
          %211 = dma.done [#allocation3], 2048
        $region44: #{tpu_custom_call.1} parent=39 // pred_fallthru
          _
        %s212 = smul.u32 8, %s20
        %p213 = scmp.lt.s32.totalorder %s212, 15
        %s214 = scalar_select %p213, %s212, 15
        %s215 = smul.addr %s214, 8
        %s216 = scalar_lea.vmem %s0, %s215
        %p217 = pneg %p41
        %p218 = pneg %p38
        %p219 = pneg %p62
        %p220 = pneg %p59
        %p221 = pneg %p83
        %p222 = pneg %p80
        %p223 = pneg %p104
        %p224 = pneg %p101
        %p225 = pneg %p125
        %p226 = pneg %p122
        %p227 = pneg %p151
        %p228 = pneg %p148
        %s229 = sand.u32 %s138, 1
        %s230 = scalar_lea.sflag [#allocation4], %s229
        %s231 = sand.u32 %s138, 1
        %s232 = smul.addr %s231, 64
        %s233 = scalar_lea.vmem [#allocation5], %s232
        %s234 = smul.u32 8, %s20
        %p235 = scmp.lt.s32.totalorder %s234, 15
        %s236 = scalar_select %p235, %s234, 15
        %s237 = smul.addr %s236, 8
        %s238 = scalar_lea.vmem %s0, %s237
        %s239 = smul.u32 8, %s20
        %s240 = smul.u32 8, %s20
        %v241 = vld [vmem:[%s1] sm:$0xff]
        %v242 = vld [vmem:[%s1 + $0x8] sm:$0xff]
        %v243 = vld [vmem:[%s1 + $0x10] sm:$0xff]
        %v244 = vld [vmem:[%s1 + $0x18] sm:$0xff]
        %v245 = vld [vmem:[%s1 + $0x20] sm:$0xff]
        %v246 = vld [vmem:[%s1 + $0x28] sm:$0xff]
        %v247 = vld [vmem:[%s1 + $0x30] sm:$0xff]
        %v248 = vld [vmem:[%s1 + $0x38] sm:$0xff]
        %v249 = vld [vmem:[%s1 + $0x40] sm:$0xff]
        %v250 = vld [vmem:[%s1 + $0x48] sm:$0xff]
        %v251 = vld [vmem:[%s1 + $0x50] sm:$0xff]
        %v252 = vld [vmem:[%s1 + $0x58] sm:$0xff]
        %v253 = vld [vmem:[%s1 + $0x60] sm:$0xff]
        %v254 = vld [vmem:[%s1 + $0x68] sm:$0xff]
        %v255 = vld [vmem:[%s1 + $0x70] sm:$0xff]
        %v256 = vld [vmem:[%s1 + $0x78] sm:$0xff]
        %v257 = vld [vmem:[%s2] sm:$0xff]
        %v258 = vld [vmem:[%s2 + $0x8] sm:$0xff]
        %v259 = vld [vmem:[%s2 + $0x10] sm:$0xff]
        %v260 = vld [vmem:[%s2 + $0x18] sm:$0xff]
        %v261 = vld [vmem:[%s2 + $0x20] sm:$0xff]
        %v262 = vld [vmem:[%s2 + $0x28] sm:$0xff]
        %v263 = vld [vmem:[%s2 + $0x30] sm:$0xff]
        %v264 = vld [vmem:[%s2 + $0x38] sm:$0xff]
        %vm265 = vcmask 523264
        %v267 = vsel %vm265, %v241, 0
        %v270 = vsel %vm265, %v242, 0
        %v273 = vsel %vm265, %v243, 0
        %v276 = vsel %vm265, %v244, 0
        %v279 = vsel %vm265, %v245, 0
        %v282 = vsel %vm265, %v246, 0
        %v285 = vsel %vm265, %v247, 0
        %v288 = vsel %vm265, %v248, 0
        %v291 = vsel %vm265, %v249, 0
        %v294 = vsel %vm265, %v250, 0
        %v297 = vsel %vm265, %v251, 0
        %v300 = vsel %vm265, %v252, 0
        %v303 = vsel %vm265, %v253, 0
        %v306 = vsel %vm265, %v254, 0
        %v309 = vsel %vm265, %v255, 0
        %v312 = vsel %vm265, %v256, 0
        %314 = vmatprep.subr.mxu0 0.0
        %315 = vmatpush1.msra.mxu0 %v257
        %316 = vmatprep.subr.mxu0 0.0
        %317 = vmatpush1.msra.mxu0 %v258
        %318 = vmatprep.subr.mxu0 0.0
        %319 = vmatpush1.msra.mxu0 %v259
        %320 = vmatprep.subr.mxu0 0.0
        %321 = vmatpush1.msra.mxu0 %v260
        %322 = vmatprep.subr.mxu0 0.0
        %323 = vmatpush1.msra.mxu0 %v261
        %324 = vmatprep.subr.mxu0 0.0
        %325 = vmatpush1.msra.mxu0 %v262
        %326 = vmatprep.subr.mxu0 0.0
        %327 = vmatpush1.msra.mxu0 %v263
        %328 = vmatprep.subr.mxu0 0.0
        %329 = vmatpush1.msra.mxu0 %v264
        %330 = vmatprep.subr.mxu0 0.0
        %331 = vmatpush1.msra.mxu0 0.0
        %332 = vmatprep.subr.mxu0 0.0
        %333 = vmatpush1.msra.mxu0 0.0
        %334 = vmatprep.subr.mxu0 0.0
        %335 = vmatpush1.msra.mxu0 0.0
        %336 = vmatprep.subr.mxu0 0.0
        %337 = vmatpush1.msra.mxu0 0.0
        %338 = vmatprep.subr.mxu0 0.0
        %339 = vmatpush1.msra.mxu0 0.0
        %340 = vmatprep.subr.mxu0 0.0
        %341 = vmatpush1.msra.mxu0 0.0
        %342 = vmatprep.subr.mxu0 0.0
        %343 = vmatpush1.msra.mxu0 0.0
        %344 = vmatprep.subr.mxu0 0.0
        %345 = vmatpush1.msra.mxu0 0.0
        %346 = vmatprep.subr.mxu0 0.0
        %347 = vmatpush1.msra.mxu0 0.0
        %348 = vmatprep.subr.mxu0 0.0
        %349 = vmatpush1.msra.mxu0 0.0
        %350 = vmatprep.subr.mxu0 0.0
        %351 = vmatpush1.msra.mxu0 0.0
        %352 = vmatprep.subr.mxu0 0.0
        %353 = vmatpush1.msra.mxu0 0.0
        %354 = vmatprep.subr.mxu0 0.0
        %355 = vmatpush1.msra.mxu0 0.0
        %356 = vmatprep.subr.mxu0 0.0
        %357 = vmatpush1.msra.mxu0 0.0
        %358 = vmatprep.subr.mxu0 0.0
        %359 = vmatpush1.msra.mxu0 0.0
        %360 = vmatprep.subr.mxu0 0.0
        %361 = vmatpush1.msra.mxu0 0.0
        %362 = vmatprep.subr.mxu0 0.0
        %363 = vmatpush1.msra.mxu0 0.0
        %364 = vmatprep.subr.mxu0 0.0
        %365 = vmatpush1.msra.mxu0 0.0
        %366 = vmatprep.subr.mxu0 0.0
        %367 = vmatpush1.msra.mxu0 0.0
        %368 = vmatprep.subr.mxu0 0.0
        %369 = vmatpush1.msra.mxu0 0.0
        %370 = vmatprep.subr.mxu0 0.0
        %371 = vmatpush1.msra.mxu0 0.0
        %372 = vmatprep.subr.mxu0 0.0
        %373 = vmatpush1.msra.mxu0 0.0
        %374 = vmatprep.subr.mxu0 0.0
        %375 = vmatpush1.msra.mxu0 0.0
        %376 = vmatprep.subr.mxu0 0.0
        %377 = vmatpush1.msra.mxu0 0.0
        %378 = vmatprep.mubr.f32.mxu0 0.0
        %379 = vmatmul.mubr.f32.gmra.mrb[0].mxu0 %v267
        %v380 = vpop.f32.mrb[0].mxu0
        %v381 = vadd.f32 0.0, %v380
        %v382 = vpop.f32.mrb[0].mxu0
        %383 = vmatprep.mubr.f32.mxu0 0.0
        %384 = vmatmul.mubr.f32.gmra.mrb[0].mxu0 %v270
        %v385 = vpop.f32.mrb[0].mxu0
        %v386 = vadd.f32 0.0, %v385
        %v387 = vpop.f32.mrb[0].mxu0
        %388 = vmatprep.mubr.f32.mxu0 0.0
        %389 = vmatmul.mubr.f32.gmra.mrb[0].mxu0 %v273
        %v390 = vpop.f32.mrb[0].mxu0
        %v391 = vadd.f32 0.0, %v390
        %v392 = vpop.f32.mrb[0].mxu0
        %393 = vmatprep.mubr.f32.mxu0 0.0
        %394 = vmatmul.mubr.f32.gmra.mrb[0].mxu0 %v276
        %v395 = vpop.f32.mrb[0].mxu0
        %v396 = vadd.f32 0.0, %v395
        %v397 = vpop.f32.mrb[0].mxu0
        %398 = vmatprep.mubr.f32.mxu0 0.0
        %399 = vmatmul.mubr.f32.gmra.mrb[0].mxu0 %v279
        %v400 = vpop.f32.mrb[0].mxu0
        %v401 = vadd.f32 0.0, %v400
        %v402 = vpop.f32.mrb[0].mxu0
        %403 = vmatprep.mubr.f32.mxu0 0.0
        %404 = vmatmul.mubr.f32.gmra.mrb[0].mxu0 %v282
        %v405 = vpop.f32.mrb[0].mxu0
        %v406 = vadd.f32 0.0, %v405
        %v407 = vpop.f32.mrb[0].mxu0
        %408 = vmatprep.mubr.f32.mxu0 0.0
        %409 = vmatmul.mubr.f32.gmra.mrb[0].mxu0 %v285
        %v410 = vpop.f32.mrb[0].mxu0
        %v411 = vadd.f32 0.0, %v410
        %v412 = vpop.f32.mrb[0].mxu0
        %413 = vmatprep.mubr.f32.mxu0 0.0
        %414 = vmatmul.mubr.f32.gmra.mrb[0].mxu0 %v288
        %v415 = vpop.f32.mrb[0].mxu0
        %v416 = vadd.f32 0.0, %v415
        %v417 = vpop.f32.mrb[0].mxu0
        %418 = vmatprep.mubr.f32.mxu0 0.0
        %419 = vmatmul.mubr.f32.gmra.mrb[0].mxu0 %v291
        %v420 = vpop.f32.mrb[0].mxu0
        %v421 = vadd.f32 0.0, %v420
        %v422 = vpop.f32.mrb[0].mxu0
        %423 = vmatprep.mubr.f32.mxu0 0.0
        %424 = vmatmul.mubr.f32.gmra.mrb[0].mxu0 %v294
        %v425 = vpop.f32.mrb[0].mxu0
        %v426 = vadd.f32 0.0, %v425
        %v427 = vpop.f32.mrb[0].mxu0
        %428 = vmatprep.mubr.f32.mxu0 0.0
        %429 = vmatmul.mubr.f32.gmra.mrb[0].mxu0 %v297
        %v430 = vpop.f32.mrb[0].mxu0
        %v431 = vadd.f32 0.0, %v430
        %v432 = vpop.f32.mrb[0].mxu0
        %433 = vmatprep.mubr.f32.mxu0 0.0
        %434 = vmatmul.mubr.f32.gmra.mrb[0].mxu0 %v300
        %v435 = vpop.f32.mrb[0].mxu0
        %v436 = vadd.f32 0.0, %v435
        %v437 = vpop.f32.mrb[0].mxu0
        %438 = vmatprep.mubr.f32.mxu0 0.0
        %439 = vmatmul.mubr.f32.gmra.mrb[0].mxu0 %v303
        %v440 = vpop.f32.mrb[0].mxu0
        %v441 = vadd.f32 0.0, %v440
        %v442 = vpop.f32.mrb[0].mxu0
        %443 = vmatprep.mubr.f32.mxu0 0.0
        %444 = vmatmul.mubr.f32.gmra.mrb[0].mxu0 %v306
        %v445 = vpop.f32.mrb[0].mxu0
        %v446 = vadd.f32 0.0, %v445
        %v447 = vpop.f32.mrb[0].mxu0
        %448 = vmatprep.mubr.f32.mxu0 0.0
        %449 = vmatmul.mubr.f32.gmra.mrb[0].mxu0 %v309
        %v450 = vpop.f32.mrb[0].mxu0
        %v451 = vadd.f32 0.0, %v450
        %v452 = vpop.f32.mrb[0].mxu0
        %453 = vmatprep.mubr.f32.mxu0 0.0
        %454 = vmatmul.mubr.f32.gmra.mrb[0].mxu0 %v312
        %v455 = vpop.f32.mrb[0].mxu0
        %v456 = vadd.f32 0.0, %v455
        %v457 = vpop.f32.mrb[0].mxu0
        %458 = vdwg.mxu0
        %v459 = vld [vmem:[%s238] sm:$0xff]
        %v460 = vld [vmem:[%s238 + $0x8] sm:$0xff]
        %v461 = vld [vmem:[%s238 + $0x10] sm:$0xff]
        %v462 = vld [vmem:[%s238 + $0x18] sm:$0xff]
        %v463 = vld [vmem:[%s238 + $0x20] sm:$0xff]
        %v464 = vld [vmem:[%s238 + $0x28] sm:$0xff]
        %v465 = vld [vmem:[%s238 + $0x30] sm:$0xff]
        %v466 = vld [vmem:[%s238 + $0x38] sm:$0xff]
        %v467 = vld [vmem:[%s3] sm:$0x1]
        %v468 = vlaneseq
        %v469 = vshrl.u32 %v468, 7
        %v470 = vsub.s32 0, %v469
        %v471 = vrot.slane %v467, %v470
        %472 = vmatprep.subr.mxu0 0.0
        %473 = vmatpush1.msra.mxu0 %v381
        %474 = vmatprep.subr.mxu0 0.0
        %475 = vmatpush1.msra.mxu0 %v386
        %476 = vmatprep.subr.mxu0 0.0
        %477 = vmatpush1.msra.mxu0 %v391
        %478 = vmatprep.subr.mxu0 0.0
        %479 = vmatpush1.msra.mxu0 %v396
        %480 = vmatprep.subr.mxu0 0.0
        %481 = vmatpush1.msra.mxu0 %v401
        %482 = vmatprep.subr.mxu0 0.0
        %483 = vmatpush1.msra.mxu0 %v406
        %484 = vmatprep.subr.mxu0 0.0
        %485 = vmatpush1.msra.mxu0 %v411
        %486 = vmatprep.subr.mxu0 0.0
        %487 = vmatpush1.msra.mxu0 %v416
        %488 = vmatprep.subr.mxu0 0.0
        %489 = vmatpush1.msra.mxu0 %v421
        %490 = vmatprep.subr.mxu0 0.0
        %491 = vmatpush1.msra.mxu0 %v426
        %492 = vmatprep.subr.mxu0 0.0
        %493 = vmatpush1.msra.mxu0 %v431
        %494 = vmatprep.subr.mxu0 0.0
        %495 = vmatpush1.msra.mxu0 %v436
        %496 = vmatprep.subr.mxu0 0.0
        %497 = vmatpush1.msra.mxu0 %v441
        %498 = vmatprep.subr.mxu0 0.0
        %499 = vmatpush1.msra.mxu0 %v446
        %500 = vmatprep.subr.mxu0 0.0
        %501 = vmatpush1.msra.mxu0 %v451
        %502 = vmatprep.subr.mxu0 0.0
        %503 = vmatpush1.msra.mxu0 %v456
        %504 = vmatprep.subr.mxu0 0.0
        %505 = vmatpush1.msra.mxu0 0.0
        %506 = vmatprep.subr.mxu0 0.0
        %507 = vmatpush1.msra.mxu0 0.0
        %508 = vmatprep.subr.mxu0 0.0
        %509 = vmatpush1.msra.mxu0 0.0
        %510 = vmatprep.subr.mxu0 0.0
        %511 = vmatpush1.msra.mxu0 0.0
        %512 = vmatprep.subr.mxu0 0.0
        %513 = vmatpush1.msra.mxu0 0.0
        %514 = vmatprep.subr.mxu0 0.0
        %515 = vmatpush1.msra.mxu0 0.0
        %516 = vmatprep.subr.mxu0 0.0
        %517 = vmatpush1.msra.mxu0 0.0
        %518 = vmatprep.subr.mxu0 0.0
        %519 = vmatpush1.msra.mxu0 0.0
        %520 = vmatprep.subr.mxu0 0.0
        %521 = vmatpush1.msra.mxu0 0.0
        %522 = vmatprep.subr.mxu0 0.0
        %523 = vmatpush1.msra.mxu0 0.0
        %524 = vmatprep.subr.mxu0 0.0
        %525 = vmatpush1.msra.mxu0 0.0
        %526 = vmatprep.subr.mxu0 0.0
        %527 = vmatpush1.msra.mxu0 0.0
        %528 = vmatprep.subr.mxu0 0.0
        %529 = vmatpush1.msra.mxu0 0.0
        %530 = vmatprep.subr.mxu0 0.0
        %531 = vmatpush1.msra.mxu0 0.0
        %532 = vmatprep.subr.mxu0 0.0
        %533 = vmatpush1.msra.mxu0 0.0
        %534 = vmatprep.subr.mxu0 0.0
        %535 = vmatpush1.msra.mxu0 0.0
        %536 = vmatprep.mubr.f32.mxu0 0.0
        %537 = vmatmul.mubr.f32.gmra.mrb[0].mxu0 %v459
        %v538 = vpop.f32.mrb[0].mxu0
        %v539 = vadd.f32 %v471, %v538
        %v540 = vpop.f32.mrb[0].mxu0
        %541 = vmatprep.mubr.f32.mxu0 0.0
        %542 = vmatmul.mubr.f32.gmra.mrb[0].mxu0 %v460
        %v543 = vpop.f32.mrb[0].mxu0
        %v544 = vadd.f32 %v471, %v543
        %v545 = vpop.f32.mrb[0].mxu0
        %546 = vmatprep.mubr.f32.mxu0 0.0
        %547 = vmatmul.mubr.f32.gmra.mrb[0].mxu0 %v461
        %v548 = vpop.f32.mrb[0].mxu0
        %v549 = vadd.f32 %v471, %v548
        %v550 = vpop.f32.mrb[0].mxu0
        %551 = vmatprep.mubr.f32.mxu0 0.0
        %552 = vmatmul.mubr.f32.gmra.mrb[0].mxu0 %v462
        %v553 = vpop.f32.mrb[0].mxu0
        %v554 = vadd.f32 %v471, %v553
        %v555 = vpop.f32.mrb[0].mxu0
        %556 = vmatprep.mubr.f32.mxu0 0.0
        %557 = vmatmul.mubr.f32.gmra.mrb[0].mxu0 %v463
        %v558 = vpop.f32.mrb[0].mxu0
        %v559 = vadd.f32 %v471, %v558
        %v560 = vpop.f32.mrb[0].mxu0
        %561 = vmatprep.mubr.f32.mxu0 0.0
        %562 = vmatmul.mubr.f32.gmra.mrb[0].mxu0 %v464
        %v563 = vpop.f32.mrb[0].mxu0
        %v564 = vadd.f32 %v471, %v563
        %v565 = vpop.f32.mrb[0].mxu0
        %566 = vmatprep.mubr.f32.mxu0 0.0
        %567 = vmatmul.mubr.f32.gmra.mrb[0].mxu0 %v465
        %v568 = vpop.f32.mrb[0].mxu0
        %v569 = vadd.f32 %v471, %v568
        %v570 = vpop.f32.mrb[0].mxu0
        %571 = vmatprep.mubr.f32.mxu0 0.0
        %572 = vmatmul.mubr.f32.gmra.mrb[0].mxu0 %v466
        %v573 = vpop.f32.mrb[0].mxu0
        %v574 = vadd.f32 %v471, %v573
        %v575 = vpop.f32.mrb[0].mxu0
        %576 = vdwg.mxu0
        %v577 = vmax.f32 %v539, 0.0
        %v578 = vmax.f32 %v544, 0.0
        %v579 = vmax.f32 %v549, 0.0
        %v580 = vmax.f32 %v554, 0.0
        %v581 = vmax.f32 %v559, 0.0
        %v582 = vmax.f32 %v564, 0.0
        %v583 = vmax.f32 %v569, 0.0
        %v584 = vmax.f32 %v574, 0.0
        %v585 = vld [vmem:[#allocation2] sm:$0xff]
        %v586 = vld [vmem:[#allocation2 + $0x8] sm:$0xff]
        %v587 = vld [vmem:[#allocation2 + $0x10] sm:$0xff]
        %v588 = vld [vmem:[#allocation2 + $0x18] sm:$0xff]
        %v589 = vld [vmem:[#allocation2 + $0x20] sm:$0xff]
        %v590 = vld [vmem:[#allocation2 + $0x28] sm:$0xff]
        %v591 = vld [vmem:[#allocation2 + $0x30] sm:$0xff]
        %v592 = vld [vmem:[#allocation2 + $0x38] sm:$0xff]
        %v593 = vld [vmem:[#allocation2 + $0x40] sm:$0xff]
        %v594 = vld [vmem:[#allocation2 + $0x48] sm:$0xff]
        %v595 = vld [vmem:[#allocation2 + $0x50] sm:$0xff]
        %v596 = vld [vmem:[#allocation2 + $0x58] sm:$0xff]
        %v597 = vld [vmem:[#allocation2 + $0x60] sm:$0xff]
        %v598 = vld [vmem:[#allocation2 + $0x68] sm:$0xff]
        %v599 = vld [vmem:[#allocation2 + $0x70] sm:$0xff]
        %v600 = vld [vmem:[#allocation2 + $0x78] sm:$0xff]
        %v601 = vld [vmem:[%s3 + $0x1] sm:$0x1]
        %v602 = vlaneseq
        %v603 = vshrl.u32 %v602, 7
        %v604 = vsub.s32 0, %v603
        %v605 = vrot.slane %v601, %v604
        %606 = vmatprep.subr.mxu0 0.0
        %607 = vmatpush1.msra.mxu0 %v585
        %608 = vmatprep.subr.mxu0 0.0
        %609 = vmatpush1.msra.mxu0 %v586
        %610 = vmatprep.subr.mxu0 0.0
        %611 = vmatpush1.msra.mxu0 %v587
        %612 = vmatprep.subr.mxu0 0.0
        %613 = vmatpush1.msra.mxu0 %v588
        %614 = vmatprep.subr.mxu0 0.0
        %615 = vmatpush1.msra.mxu0 %v589
        %616 = vmatprep.subr.mxu0 0.0
        %617 = vmatpush1.msra.mxu0 %v590
        %618 = vmatprep.subr.mxu0 0.0
        %619 = vmatpush1.msra.mxu0 %v591
        %620 = vmatprep.subr.mxu0 0.0
        %621 = vmatpush1.msra.mxu0 %v592
        %622 = vmatprep.subr.mxu0 0.0
        %623 = vmatpush1.msra.mxu0 %v593
        %624 = vmatprep.subr.mxu0 0.0
        %625 = vmatpush1.msra.mxu0 %v594
        %626 = vmatprep.subr.mxu0 0.0
        %627 = vmatpush1.msra.mxu0 %v595
        %628 = vmatprep.subr.mxu0 0.0
        %629 = vmatpush1.msra.mxu0 %v596
        %630 = vmatprep.subr.mxu0 0.0
        %631 = vmatpush1.msra.mxu0 %v597
        %632 = vmatprep.subr.mxu0 0.0
        %633 = vmatpush1.msra.mxu0 %v598
        %634 = vmatprep.subr.mxu0 0.0
        %635 = vmatpush1.msra.mxu0 %v599
        %636 = vmatprep.subr.mxu0 0.0
        %637 = vmatpush1.msra.mxu0 %v600
        %638 = vmatprep.subr.mxu0 0.0
        %639 = vmatpush1.msra.mxu0 0.0
        %640 = vmatprep.subr.mxu0 0.0
        %641 = vmatpush1.msra.mxu0 0.0
        %642 = vmatprep.subr.mxu0 0.0
        %643 = vmatpush1.msra.mxu0 0.0
        %644 = vmatprep.subr.mxu0 0.0
        %645 = vmatpush1.msra.mxu0 0.0
        %646 = vmatprep.subr.mxu0 0.0
        %647 = vmatpush1.msra.mxu0 0.0
        %648 = vmatprep.subr.mxu0 0.0
        %649 = vmatpush1.msra.mxu0 0.0
        %650 = vmatprep.subr.mxu0 0.0
        %651 = vmatpush1.msra.mxu0 0.0
        %652 = vmatprep.subr.mxu0 0.0
        %653 = vmatpush1.msra.mxu0 0.0
        %654 = vmatprep.subr.mxu0 0.0
        %655 = vmatpush1.msra.mxu0 0.0
        %656 = vmatprep.subr.mxu0 0.0
        %657 = vmatpush1.msra.mxu0 0.0
        %658 = vmatprep.subr.mxu0 0.0
        %659 = vmatpush1.msra.mxu0 0.0
        %660 = vmatprep.subr.mxu0 0.0
        %661 = vmatpush1.msra.mxu0 0.0
        %662 = vmatprep.subr.mxu0 0.0
        %663 = vmatpush1.msra.mxu0 0.0
        %664 = vmatprep.subr.mxu0 0.0
        %665 = vmatpush1.msra.mxu0 0.0
        %666 = vmatprep.subr.mxu0 0.0
        %667 = vmatpush1.msra.mxu0 0.0
        %668 = vmatprep.subr.mxu0 0.0
        %669 = vmatpush1.msra.mxu0 0.0
        %670 = vmatprep.mubr.f32.mxu0 0.0
        %671 = vmatmul.mubr.f32.gmra.mrb[0].mxu0 %v577
        %v672 = vpop.f32.mrb[0].mxu0
        %v673 = vadd.f32 %v605, %v672
        %v674 = vpop.f32.mrb[0].mxu0
        %675 = vmatprep.mubr.f32.mxu0 0.0
        %676 = vmatmul.mubr.f32.gmra.mrb[0].mxu0 %v578
        %v677 = vpop.f32.mrb[0].mxu0
        %v678 = vadd.f32 %v605, %v677
        %v679 = vpop.f32.mrb[0].mxu0
        %680 = vmatprep.mubr.f32.mxu0 0.0
        %681 = vmatmul.mubr.f32.gmra.mrb[0].mxu0 %v579
        %v682 = vpop.f32.mrb[0].mxu0
        %v683 = vadd.f32 %v605, %v682
        %v684 = vpop.f32.mrb[0].mxu0
        %685 = vmatprep.mubr.f32.mxu0 0.0
        %686 = vmatmul.mubr.f32.gmra.mrb[0].mxu0 %v580
        %v687 = vpop.f32.mrb[0].mxu0
        %v688 = vadd.f32 %v605, %v687
        %v689 = vpop.f32.mrb[0].mxu0
        %690 = vmatprep.mubr.f32.mxu0 0.0
        %691 = vmatmul.mubr.f32.gmra.mrb[0].mxu0 %v581
        %v692 = vpop.f32.mrb[0].mxu0
        %v693 = vadd.f32 %v605, %v692
        %v694 = vpop.f32.mrb[0].mxu0
        %695 = vmatprep.mubr.f32.mxu0 0.0
        %696 = vmatmul.mubr.f32.gmra.mrb[0].mxu0 %v582
        %v697 = vpop.f32.mrb[0].mxu0
        %v698 = vadd.f32 %v605, %v697
        %v699 = vpop.f32.mrb[0].mxu0
        %700 = vmatprep.mubr.f32.mxu0 0.0
        %701 = vmatmul.mubr.f32.gmra.mrb[0].mxu0 %v583
        %v702 = vpop.f32.mrb[0].mxu0
        %v703 = vadd.f32 %v605, %v702
        %v704 = vpop.f32.mrb[0].mxu0
        %705 = vmatprep.mubr.f32.mxu0 0.0
        %706 = vmatmul.mubr.f32.gmra.mrb[0].mxu0 %v584
        %v707 = vpop.f32.mrb[0].mxu0
        %v708 = vadd.f32 %v605, %v707
        %v709 = vpop.f32.mrb[0].mxu0
        %710 = vdwg.mxu0
        %711 = vst [vmem:[%s233] sm:$0xff] %v673
        %712 = vst [vmem:[%s233 + $0x8] sm:$0xff] %v678
        %713 = vst [vmem:[%s233 + $0x10] sm:$0xff] %v683
        %714 = vst [vmem:[%s233 + $0x18] sm:$0xff] %v688
        %715 = vst [vmem:[%s233 + $0x20] sm:$0xff] %v693
        %716 = vst [vmem:[%s233 + $0x28] sm:$0xff] %v698
        %717 = vst [vmem:[%s233 + $0x30] sm:$0xff] %v703
        %718 = vst [vmem:[%s233 + $0x38] sm:$0xff] %v708
        %s719 = sand.u32 %s138, 1
        %s720 = scalar_lea.sflag [#allocation4], %s719
        %s721 = sand.u32 %s138, 1
        %s722 = smul.addr %s721, 64
        %s723 = scalar_lea.vmem [#allocation5], %s722
        // Predicated region
        $region45: #{tpu_custom_call.1} parent=39 // pred_check
          %p724 = pneg %p148
        $region46: #{tpu_custom_call.1} parent=39 // pred_check_branch
          %726 = sbr.rel (%p724) target = $region48
        $region47: #{tpu_custom_call.1} parent=39 // pred_region
          %s727 = smul.u32 8, %s20
          %s729 = ssub.s32 1024, 1024
          %730 = vsyncadd %s720, %s729
          %s731 = smul.addr %s727, 128
          %s732 = scalar_lea.hbm %s5, %s731
          %s733 = sshll.u32 %s723, 4
          %s734 = int_to_ptr.vmem [resolvable:$true] %s733
          %739 = dma.vmem_to_hbm [thread:$0]  %s734, 1024, %s732, %s720, 128, 128, 8
        $region48: #{tpu_custom_call.1} parent=39 // pred_fallthru
          _
      $region40: #{tpu_custom_call.1} parent=5 // pred_fallthru
        _
      %p740 = scmp.le.s32.totalorder 2, %s15
      // Predicated region
      $region49: #{tpu_custom_call.1} parent=5 // pred_check
        %p741 = pneg %p740
      $region50: #{tpu_custom_call.1} parent=5 // pred_check_branch
        %743 = sbr.rel (%p741) target = $region52
      $region51: #{tpu_custom_call.1} parent=5 // pred_region
        %s744 = ssub.s32 %s15, 2
        // Predicated region
        $region53: #{tpu_custom_call.1} parent=51 // pred_check
          %p745 = pneg %p154
        $region54: #{tpu_custom_call.1} parent=51 // pred_check_branch
          %747 = sbr.rel (%p745) target = $region56
        $region55: #{tpu_custom_call.1} parent=51 // pred_region
          %s748 = sand.u32 %s139, 1
          %s749 = scalar_lea.sflag [#allocation4], %s748
          %s750 = sand.u32 %s139, 1
          %s751 = smul.addr %s750, 64
          %s752 = scalar_lea.vmem [#allocation5], %s751
          %753 = dma.done %s749, 1024
        $region56: #{tpu_custom_call.1} parent=51 // pred_fallthru
          _
      $region52: #{tpu_custom_call.1} parent=5 // pred_fallthru
        _
    $region6: #{tpu_custom_call.1} parent=1 // loop_footer
      %s19 = sadd.s32 1, %s15
    $region7: #{tpu_custom_call.1} parent=1 // loop_footer_branch
      %14 = sbr.rel target = $region3
    $region8: #{tpu_custom_call.1} parent=1 // loop_exit
      _
    %754 = vsyncpa [#allocation3], 1
    %s755 = scalar_lea.sflag [#allocation3], 1
    %756 = vsyncpa %s755, 1
    %757 = vsyncpa [#allocation4], 1
    %s758 = scalar_lea.sflag [#allocation4], 1
    %759 = vsyncpa %s758, 1

</llo_original>
